<compile_context>
chip_gen: v7x
topology: tpu7x:2x2x1
jax: 0.10.0
libtpu: 0.0.40
codegen_flags: <defaults>
</compile_context>

<pallas_src>
import functools
from typing import NamedTuple

import jax
import jax.numpy as jnp
import numpy as np
from jax.experimental import pallas as pl
from jax.experimental.pallas import tpu as pltpu


class NormalDistribution(NamedTuple):
    mu: jax.Array
    sigma: jax.Array
    logsigma: jax.Array
    v: jax.Array
    r: jax.Array


# ----------------------------------------------------------------------------
# Pallas kernel: whole forward pass, gridless, everything in VMEM.
# Two MXU pushes, rest is VPU/XLU work; three direct stores.
# ----------------------------------------------------------------------------
def _transition_kernel(act_ref, w_ref, out_ref, *, dim_z, dim_u, hidden, batch_p):
    n1 = hidden + dim_z + dim_z * dim_u

    # Packed activation block (all row offsets are multiples of 8 sublanes).
    h = act_ref[0:batch_p, 0:dim_z]                          # (bp, Z)
    mu = act_ref[batch_p:2 * batch_p, 0:dim_z]               # (bp, Z)
    u_exp = act_ref[2 * batch_p:3 * batch_p, 0:dim_u * dim_z]  # (bp, U*Z), u-major

    # Packed weight slab segments (static row/lane offsets, lane offset 0).
    wcat = w_ref[0:dim_z, 0:n1]                              # [W1 | Wo | Wb_perm]
    w2 = w_ref[dim_z:dim_z + hidden, 0:2 * dim_z]            # trans layer-2
    b_row0 = w_ref[dim_z + hidden:dim_z + hidden + 1, 0:n1]          # [b1|bo|bb_perm]
    b_row1 = w_ref[dim_z + hidden + 1:dim_z + hidden + 2, 0:2 * dim_z]  # [b2]

    # MXU push 1: h @ [W1 | Wo | Wb_perm]  (one fused push instead of 3+U).
    hcat = jnp.dot(h, wcat, preferred_element_type=jnp.float32) + b_row0
    hid = jnp.maximum(hcat[:, :hidden], 0.0)                 # trans layer-1 + ReLU
    o = hcat[:, hidden:hidden + dim_z]                       # fc_o(h)
    bflat = hcat[:, hidden + dim_z:n1]                       # fc_B(h), u-major layout

    # MXU push 2: hid @ W2 -> (v | r).
    vr = jnp.dot(hid, w2, preferred_element_type=jnp.float32) + b_row1
    v = vr[:, :dim_z]
    r = vr[:, dim_z:2 * dim_z]

    # B(h) @ u without (B, Z, U): elementwise with pre-expanded u, sum U segments.
    prod = bflat * u_exp
    bu = prod[:, 0:dim_z]
    for k in range(1, dim_u):
        bu = bu + prod[:, k * dim_z:(k + 1) * dim_z]
    t = bu + o                                               # shared additive term

    # A = I + v r^T applied per half (no sublane concats): A@x = x + v*(r.x).
    sample = h + v * jnp.sum(r * h, axis=1, keepdims=True) + t
    d = mu + v * jnp.sum(r * mu, axis=1, keepdims=True) + t

    # Epilogue: direct sub-stores (rows bp: of lanes Z:3Z are never read).
    out_ref[0:batch_p, 0:dim_z] = sample
    out_ref[batch_p:2 * batch_p, 0:dim_z] = d
    out_ref[0:batch_p, dim_z:3 * dim_z] = vr


# ----------------------------------------------------------------------------
# One-time parameter preparation (out of the per-call hot path).
# PyTorch Linear weights are (out, in); transpose, permute fc_B columns to
# u-major order, and pack everything into ONE padded f32 slab.
# ----------------------------------------------------------------------------
def prepare_transition_params(params, dim_z, dim_u):
    hidden = int(params["w1"].shape[0])
    n1 = hidden + dim_z + dim_z * dim_u

    w1t = jnp.asarray(params["w1"], jnp.float32).T                     # (Z, hidden)
    wot = jnp.asarray(params["wo"], jnp.float32).T                     # (Z, Z)
    wbt = jnp.asarray(params["wb"], jnp.float32).T                     # (Z, Z*U)
    # permute fc_B columns to u-major: col k*Z + z  <->  B[:, z, k]
    wb_perm = wbt.reshape(dim_z, dim_z, dim_u).transpose(0, 2, 1).reshape(dim_z, dim_u * dim_z)
    bb_perm = jnp.asarray(params["bb"], jnp.float32).reshape(dim_z, dim_u).T.reshape(dim_u * dim_z)

    wcat = jnp.concatenate([w1t, wot, wb_perm], axis=1)                # (Z, n1)
    w2t = jnp.asarray(params["w2"], jnp.float32).T                     # (hidden, 2Z)
    bias0 = jnp.concatenate([jnp.asarray(params["b1"], jnp.float32),
                             jnp.asarray(params["bo"], jnp.float32),
                             bb_perm])                                  # (n1,)
    bias1 = jnp.asarray(params["b2"], jnp.float32)                     # (2Z,)

    rows = dim_z + hidden + 2
    rows_p = -(-rows // 8) * 8
    lanes_p = -(-max(n1, 2 * dim_z) // 128) * 128
    slab = jnp.zeros((rows_p, lanes_p), jnp.float32)
    slab = slab.at[0:dim_z, 0:n1].set(wcat)
    slab = slab.at[dim_z:dim_z + hidden, 0:2 * dim_z].set(w2t)
    slab = slab.at[dim_z + hidden, 0:n1].set(bias0)
    slab = slab.at[dim_z + hidden + 1, 0:2 * dim_z].set(bias1)
    return {"w_slab": slab, "hidden": hidden}


# ----------------------------------------------------------------------------
# Per-call wrapper (jitted so the packing / slicing plumbing fuses with the call).
# ----------------------------------------------------------------------------
@functools.partial(jax.jit, static_argnames=("hidden",))
def transition_forward(w_slab, h, q_mu, q_sigma, q_logsigma, u, *, hidden):
    batch, dim_z = h.shape
    dim_u = u.shape[1]
    batch_p = -(-batch // 8) * 8                       # full 8-sublane tiles
    lanes_a = max(dim_z, dim_u * dim_z)

    # u pre-expanded to u-major Z-wide lanes: u_exp[:, k*Z + z] = u[:, k]
    u_exp = jnp.repeat(u.astype(jnp.float32), dim_z, axis=1)

    act = jnp.zeros((3 * batch_p, lanes_a), jnp.float32)
    act = act.at[0:batch, 0:dim_z].set(h.astype(jnp.float32))
    act = act.at[batch_p:batch_p + batch, 0:dim_z].set(q_mu.astype(jnp.float32))
    act = act.at[2 * batch_p:2 * batch_p + batch, 0:dim_u * dim_z].set(u_exp)

    kernel = functools.partial(_transition_kernel, dim_z=dim_z, dim_u=dim_u,
                               hidden=hidden, batch_p=batch_p)
    vmem = pl.BlockSpec(memory_space=pltpu.MemorySpace.VMEM)
    out = pl.pallas_call(
        kernel,
        out_shape=jax.ShapeDtypeStruct((2 * batch_p, 3 * dim_z), jnp.float32),
        in_specs=[vmem, vmem],
        out_specs=vmem,
    )(act, w_slab)

    sample = out[:batch, :dim_z]
    d = out[batch_p:batch_p + batch, :dim_z]
    v = out[:batch, dim_z:2 * dim_z]
    r = out[:batch, 2 * dim_z:3 * dim_z]
    return sample, NormalDistribution(mu=d, sigma=q_sigma, logsigma=q_logsigma, v=v, r=r)


# ----------------------------------------------------------------------------
# Pure-JAX reference mirroring the PyTorch forward (for verification only).
# ----------------------------------------------------------------------------
def transition_reference(params, h, q_mu, u, dim_z, dim_u):
    def linear(x, w, b):  # PyTorch convention: w is (out, in)
        return x @ w.T + b

    hid = jnp.maximum(linear(h, params["w1"], params["b1"]), 0.0)
    vr = linear(hid, params["w2"], params["b2"])
    v, r = vr[:, :dim_z], vr[:, dim_z:]
    batch = h.shape[0]
    I = jnp.broadcast_to(jnp.eye(dim_z, dtype=jnp.float32), (batch, dim_z, dim_z))
    A = I + v[:, :, None] @ r[:, None, :]
    Bm = linear(h, params["wb"], params["bb"]).reshape(batch, dim_z, dim_u)
    o = linear(h, params["wo"], params["bo"])
    d = (A @ q_mu[:, :, None] + Bm @ u[:, :, None])[..., 0] + o
    sample = (A @ h[:, :, None] + Bm @ u[:, :, None])[..., 0] + o
    return sample, d, v, r


if __name__ == "__main__":
    batch, dim_z, dim_u, hidden = 4, 8, 2, 32

    key = jax.random.PRNGKey(0)
    ks = jax.random.split(key, 16)

    # Deterministic synthetic parameters (PyTorch Linear shapes: weight (out, in)).
    params = {
        "w1": jax.random.normal(ks[0], (hidden, dim_z), jnp.float32) * 0.3,
        "b1": jax.random.normal(ks[1], (hidden,), jnp.float32) * 0.1,
        "w2": jax.random.normal(ks[2], (2 * dim_z, hidden), jnp.float32) * 0.3,
        "b2": jax.random.normal(ks[3], (2 * dim_z,), jnp.float32) * 0.1,
        "wb": jax.random.normal(ks[4], (dim_z * dim_u, dim_z), jnp.float32) * 0.3,
        "bb": jax.random.normal(ks[5], (dim_z * dim_u,), jnp.float32) * 0.1,
        "wo": jax.random.normal(ks[6], (dim_z, dim_z), jnp.float32) * 0.3,
        "bo": jax.random.normal(ks[7], (dim_z,), jnp.float32) * 0.1,
    }

    h = jax.random.normal(ks[8], (batch, dim_z), jnp.float32)
    u = jax.random.normal(ks[9], (batch, dim_u), jnp.float32)
    q_mu = jax.random.normal(ks[10], (batch, dim_z), jnp.float32)
    q_logsigma = jax.random.normal(ks[11], (batch, dim_z), jnp.float32) * 0.1
    q_sigma = jnp.exp(q_logsigma)

    # One-time parameter packing (fused/transposed weight slab), then the hot call.
    prepped = prepare_transition_params(params, dim_z, dim_u)
    jax.block_until_ready(prepped["w_slab"])

    sample, dist = transition_forward(prepped["w_slab"], h, q_mu, q_sigma, q_logsigma, u,
                                      hidden=prepped["hidden"])
    jax.block_until_ready((sample, dist.mu, dist.v, dist.r))

    # Verify against the PyTorch-equivalent pure-JAX reference.
    ref_sample, ref_d, ref_v, ref_r = transition_reference(params, h, q_mu, u, dim_z, dim_u)
    np.testing.assert_allclose(np.asarray(sample), np.asarray(ref_sample), rtol=1e-5, atol=1e-5)
    np.testing.assert_allclose(np.asarray(dist.mu), np.asarray(ref_d), rtol=1e-5, atol=1e-5)
    np.testing.assert_allclose(np.asarray(dist.v), np.asarray(ref_v), rtol=1e-5, atol=1e-5)
    np.testing.assert_allclose(np.asarray(dist.r), np.asarray(ref_r), rtol=1e-5, atol=1e-5)

    print("KERNEL_OK")
</pallas_src>

<mosaic_0001>
module attributes {stable_mosaic.version = 11 : i64} {
  func.func @_transition_kernel(%arg0: memref<24x16xf32, #tpu.memory_space<vmem>>, %arg1: memref<48x128xf32, #tpu.memory_space<vmem>>, %arg2: memref<16x24xf32, #tpu.memory_space<vmem>>) attributes {dimension_semantics = [], scalar_prefetch = 0 : i64, scratch_operands = 0 : i64, tpu.core_type = #tpu.core_type<tc>} {
    %c0 = arith.constant 0 : index
    %c0_0 = arith.constant 0 : index
    %0 = vector.load %arg0[%c0, %c0_0] : memref<24x16xf32, #tpu.memory_space<vmem>>, vector<8x8xf32>
    %c8 = arith.constant 8 : index
    %c0_1 = arith.constant 0 : index
    %1 = vector.load %arg0[%c8, %c0_1] : memref<24x16xf32, #tpu.memory_space<vmem>>, vector<8x8xf32>
    %c16 = arith.constant 16 : index
    %c0_2 = arith.constant 0 : index
    %2 = vector.load %arg0[%c16, %c0_2] : memref<24x16xf32, #tpu.memory_space<vmem>>, vector<8x16xf32>
    %c0_3 = arith.constant 0 : index
    %c0_4 = arith.constant 0 : index
    %3 = vector.load %arg1[%c0_3, %c0_4] : memref<48x128xf32, #tpu.memory_space<vmem>>, vector<8x56xf32>
    %c8_5 = arith.constant 8 : index
    %c0_6 = arith.constant 0 : index
    %4 = vector.load %arg1[%c8_5, %c0_6] : memref<48x128xf32, #tpu.memory_space<vmem>>, vector<32x16xf32>
    %c40 = arith.constant 40 : index
    %c0_7 = arith.constant 0 : index
    %5 = vector.load %arg1[%c40, %c0_7] : memref<48x128xf32, #tpu.memory_space<vmem>>, vector<1x56xf32>
    %c41 = arith.constant 41 : index
    %c0_8 = arith.constant 0 : index
    %6 = vector.load %arg1[%c41, %c0_8] : memref<48x128xf32, #tpu.memory_space<vmem>>, vector<1x16xf32>
    %cst = arith.constant dense<0.000000e+00> : vector<8x56xf32>
    %7 = tpu.matmul %0, %3, %cst {dimension_numbers = #tpu.dot_dimension_numbers<[1], [0], [0], [1], [0, 0, 1, 1], [], []>} : vector<8x8xf32>, vector<8x56xf32>, vector<8x56xf32> -> vector<8x56xf32>
    %8 = vector.broadcast %5 : vector<1x56xf32> to vector<8x56xf32>
    %9 = arith.addf %7, %8 : vector<8x56xf32>
    %10 = vector.extract_strided_slice %9 {offsets = [0, 0], sizes = [8, 32], strides = [1, 1]} : vector<8x56xf32> to vector<8x32xf32>
    %cst_9 = arith.constant 0.000000e+00 : f32
    %11 = vector.broadcast %cst_9 : f32 to vector<8x32xf32>
    %12 = arith.maximumf %10, %11 : vector<8x32xf32>
    %13 = vector.extract_strided_slice %9 {offsets = [0, 32], sizes = [8, 8], strides = [1, 1]} : vector<8x56xf32> to vector<8x8xf32>
    %14 = vector.extract_strided_slice %9 {offsets = [0, 40], sizes = [8, 16], strides = [1, 1]} : vector<8x56xf32> to vector<8x16xf32>
    %cst_10 = arith.constant dense<0.000000e+00> : vector<8x16xf32>
    %15 = tpu.matmul %12, %4, %cst_10 {dimension_numbers = #tpu.dot_dimension_numbers<[1], [0], [0], [1], [0, 0, 1, 1], [], []>} : vector<8x32xf32>, vector<32x16xf32>, vector<8x16xf32> -> vector<8x16xf32>
    %16 = vector.broadcast %6 : vector<1x16xf32> to vector<8x16xf32>
    %17 = arith.addf %15, %16 : vector<8x16xf32>
    %18 = vector.extract_strided_slice %17 {offsets = [0, 0], sizes = [8, 8], strides = [1, 1]} : vector<8x16xf32> to vector<8x8xf32>
    %19 = vector.extract_strided_slice %17 {offsets = [0, 8], sizes = [8, 8], strides = [1, 1]} : vector<8x16xf32> to vector<8x8xf32>
    %20 = arith.mulf %14, %2 : vector<8x16xf32>
    %21 = vector.extract_strided_slice %20 {offsets = [0, 0], sizes = [8, 8], strides = [1, 1]} : vector<8x16xf32> to vector<8x8xf32>
    %22 = vector.extract_strided_slice %20 {offsets = [0, 8], sizes = [8, 8], strides = [1, 1]} : vector<8x16xf32> to vector<8x8xf32>
    %23 = arith.addf %21, %22 : vector<8x8xf32>
    %24 = arith.addf %23, %13 : vector<8x8xf32>
    %25 = arith.mulf %19, %0 : vector<8x8xf32>
    %cst_11 = arith.constant dense<0.000000e+00> : vector<8xf32>
    %26 = vector.multi_reduction <add>, %25, %cst_11 [1] : vector<8x8xf32> to vector<8xf32>
    %27 = vector.shape_cast %26 : vector<8xf32> to vector<8x1xf32>
    %28 = vector.broadcast %27 : vector<8x1xf32> to vector<8x8xf32>
    %29 = arith.mulf %18, %28 : vector<8x8xf32>
    %30 = arith.addf %0, %29 : vector<8x8xf32>
    %31 = arith.addf %30, %24 : vector<8x8xf32>
    %32 = arith.mulf %19, %1 : vector<8x8xf32>
    %cst_12 = arith.constant dense<0.000000e+00> : vector<8xf32>
    %33 = vector.multi_reduction <add>, %32, %cst_12 [1] : vector<8x8xf32> to vector<8xf32>
    %34 = vector.shape_cast %33 : vector<8xf32> to vector<8x1xf32>
    %35 = vector.broadcast %34 : vector<8x1xf32> to vector<8x8xf32>
    %36 = arith.mulf %18, %35 : vector<8x8xf32>
    %37 = arith.addf %1, %36 : vector<8x8xf32>
    %38 = arith.addf %37, %24 : vector<8x8xf32>
    %c0_13 = arith.constant 0 : index
    %c0_14 = arith.constant 0 : index
    %39 = vector.load %arg2[%c0_13, %c0_14] : memref<16x24xf32, #tpu.memory_space<vmem>>, vector<8x8xf32>
    tpu.vector_store %arg2[%c0_13, %c0_14], %31 {strides = array<i32>} : memref<16x24xf32, #tpu.memory_space<vmem>>, vector<8x8xf32>,
    %c8_15 = arith.constant 8 : index
    %c0_16 = arith.constant 0 : index
    %40 = vector.load %arg2[%c8_15, %c0_16] : memref<16x24xf32, #tpu.memory_space<vmem>>, vector<8x8xf32>
    tpu.vector_store %arg2[%c8_15, %c0_16], %38 {strides = array<i32>} : memref<16x24xf32, #tpu.memory_space<vmem>>, vector<8x8xf32>,
    %c0_17 = arith.constant 0 : index
    %c8_18 = arith.constant 8 : index
    %41 = vector.load %arg2[%c0_17, %c8_18] : memref<16x24xf32, #tpu.memory_space<vmem>>, vector<8x16xf32>
    tpu.vector_store %arg2[%c0_17, %c8_18], %17 {strides = array<i32>} : memref<16x24xf32, #tpu.memory_space<vmem>>, vector<8x16xf32>,
    return
  }
}

</mosaic_0001>

<llo_original>
// kernel: transition_forward.1
$region0: #{transition_forward.1}
  #allocation0 [shape = 'u32[]', space=smem, size = 0x4, offset = 0x4, fixed_abs, tag = 'smem constant byte address 0x4 - core index']
  #allocation1 [shape = 'u32[144,128]{1,0:T(1,128)}', space=vmem, size = 0x12000, scoped, tag = 'internal scratch']
  %s0 = inlined_call_operand.vmem [shape: f32[24,16], index: 0, kind: input, shape index: {}]
  %s1 = inlined_call_operand.vmem [shape: f32[48,128], index: 1, kind: input, shape index: {}]
  %s2 = inlined_call_operand.vmem [shape: f32[16,24], index: 2, kind: output, shape index: {}]
  %s3 = sld [smem:[#allocation0]]
  $region18: #{transition_forward.1} parent=0
    _
  %s5 = ssub.s32 1, %s3
  %s6 = scalar_select 0, %s5, %s3
  // Predicated region
  $region2: #{transition_forward.1} parent=0 // pred_check
    _
  $region3: #{transition_forward.1} parent=0 // pred_check_branch
    %8 = sbr.rel (0) target = $region5
  $region4: #{transition_forward.1} parent=0 // pred_region
    _
  $region5: #{transition_forward.1} parent=0 // pred_fallthru
    _
  // Predicated region
  $region6: #{transition_forward.1} parent=0 // pred_check
    _
  $region7: #{transition_forward.1} parent=0 // pred_check_branch
    %10 = sbr.rel (0) target = $region9
  $region8: #{transition_forward.1} parent=0 // pred_region
    _
  $region9: #{transition_forward.1} parent=0 // pred_fallthru
    _
  %v11 = vld [vmem:[%s0] sm:$0xff]
  %v12 = vld [vmem:[%s0 + $0x8] sm:$0xff]
  %v13 = vld [vmem:[%s0 + $0x10] sm:$0xff]
  %v14 = vld [vmem:[%s1] sm:$0xff]
  %v15 = vld [vmem:[%s1 + $0x8] sm:$0xff]
  %v16 = vld [vmem:[%s1 + $0x10] sm:$0xff]
  %v17 = vld [vmem:[%s1 + $0x18] sm:$0xff]
  %v18 = vld [vmem:[%s1 + $0x20] sm:$0xff]
  %v19 = vld [vmem:[%s1 + $0x28] sm:$0x1]
  %v20 = vld [vmem:[%s1 + $0x29] sm:$0x1]
  %v21 = vlaneseq
  %v22 = vshrl.u32 %v21, 7
  %v23 = vsub.s32 0, %v22
  %v24 = vrot.slane %v19, %v23
  %vm25 = vcmask 64512
  %v27 = vsel %vm25, %v11, 0
  %29 = vmatprep.subr.mxu0 0.0
  %30 = vmatpush1.msra.mxu0 %v14
  %31 = vmatprep.subr.mxu0 0.0
  %32 = vmatpush1.msra.mxu0 0.0
  %33 = vmatprep.subr.mxu0 0.0
  %34 = vmatpush1.msra.mxu0 0.0
  %35 = vmatprep.subr.mxu0 0.0
  %36 = vmatpush1.msra.mxu0 0.0
  %37 = vmatprep.subr.mxu0 0.0
  %38 = vmatpush1.msra.mxu0 0.0
  %39 = vmatprep.subr.mxu0 0.0
  %40 = vmatpush1.msra.mxu0 0.0
  %41 = vmatprep.subr.mxu0 0.0
  %42 = vmatpush1.msra.mxu0 0.0
  %43 = vmatprep.subr.mxu0 0.0
  %44 = vmatpush1.msra.mxu0 0.0
  %45 = vmatprep.subr.mxu0 0.0
  %46 = vmatpush1.msra.mxu0 0.0
  %47 = vmatprep.subr.mxu0 0.0
  %48 = vmatpush1.msra.mxu0 0.0
  %49 = vmatprep.subr.mxu0 0.0
  %50 = vmatpush1.msra.mxu0 0.0
  %51 = vmatprep.subr.mxu0 0.0
  %52 = vmatpush1.msra.mxu0 0.0
  %53 = vmatprep.subr.mxu0 0.0
  %54 = vmatpush1.msra.mxu0 0.0
  %55 = vmatprep.subr.mxu0 0.0
  %56 = vmatpush1.msra.mxu0 0.0
  %57 = vmatprep.subr.mxu0 0.0
  %58 = vmatpush1.msra.mxu0 0.0
  %59 = vmatprep.subr.mxu0 0.0
  %60 = vmatpush1.msra.mxu0 0.0
  %61 = vmatprep.subr.mxu0 0.0
  %62 = vmatpush1.msra.mxu0 0.0
  %63 = vmatprep.subr.mxu0 0.0
  %64 = vmatpush1.msra.mxu0 0.0
  %65 = vmatprep.subr.mxu0 0.0
  %66 = vmatpush1.msra.mxu0 0.0
  %67 = vmatprep.subr.mxu0 0.0
  %68 = vmatpush1.msra.mxu0 0.0
  %69 = vmatprep.subr.mxu0 0.0
  %70 = vmatpush1.msra.mxu0 0.0
  %71 = vmatprep.subr.mxu0 0.0
  %72 = vmatpush1.msra.mxu0 0.0
  %73 = vmatprep.subr.mxu0 0.0
  %74 = vmatpush1.msra.mxu0 0.0
  %75 = vmatprep.subr.mxu0 0.0
  %76 = vmatpush1.msra.mxu0 0.0
  %77 = vmatprep.subr.mxu0 0.0
  %78 = vmatpush1.msra.mxu0 0.0
  %79 = vmatprep.subr.mxu0 0.0
  %80 = vmatpush1.msra.mxu0 0.0
  %81 = vmatprep.subr.mxu0 0.0
  %82 = vmatpush1.msra.mxu0 0.0
  %83 = vmatprep.subr.mxu0 0.0
  %84 = vmatpush1.msra.mxu0 0.0
  %85 = vmatprep.subr.mxu0 0.0
  %86 = vmatpush1.msra.mxu0 0.0
  %87 = vmatprep.subr.mxu0 0.0
  %88 = vmatpush1.msra.mxu0 0.0
  %89 = vmatprep.subr.mxu0 0.0
  %90 = vmatpush1.msra.mxu0 0.0
  %91 = vmatprep.subr.mxu0 0.0
  %92 = vmatpush1.msra.mxu0 0.0
  %93 = vmatprep.mubr.f32.mxu0 0.0
  %94 = vmatmul.mubr.f32.gmra.mrb[0].mxu0 %v27
  %v95 = vpop.f32.mrb[0].mxu0
  %v96 = vadd.f32 %v24, %v95
  %v97 = vpop.f32.mrb[0].mxu0
  %98 = vdwg.mxu0
  %v99 = vmax.f32 %v96, 0.0
  %v100 = vlaneseq
  %v101 = vshrl.u32 %v100, 7
  %v102 = vsub.s32 0, %v101
  %v103 = vrot.slane %v20, %v102
  %vm104 = vcmask 261120
  %v106 = vsel %vm104, %v99, 0
  %108 = vmatprep.subr.mxu0 0.0
  %109 = vmatpush1.msra.mxu0 %v15
  %110 = vmatprep.subr.mxu0 0.0
  %111 = vmatpush1.msra.mxu0 %v16
  %112 = vmatprep.subr.mxu0 0.0
  %113 = vmatpush1.msra.mxu0 %v17
  %114 = vmatprep.subr.mxu0 0.0
  %115 = vmatpush1.msra.mxu0 %v18
  %116 = vmatprep.subr.mxu0 0.0
  %117 = vmatpush1.msra.mxu0 0.0
  %118 = vmatprep.subr.mxu0 0.0
  %119 = vmatpush1.msra.mxu0 0.0
  %120 = vmatprep.subr.mxu0 0.0
  %121 = vmatpush1.msra.mxu0 0.0
  %122 = vmatprep.subr.mxu0 0.0
  %123 = vmatpush1.msra.mxu0 0.0
  %124 = vmatprep.subr.mxu0 0.0
  %125 = vmatpush1.msra.mxu0 0.0
  %126 = vmatprep.subr.mxu0 0.0
  %127 = vmatpush1.msra.mxu0 0.0
  %128 = vmatprep.subr.mxu0 0.0
  %129 = vmatpush1.msra.mxu0 0.0
  %130 = vmatprep.subr.mxu0 0.0
  %131 = vmatpush1.msra.mxu0 0.0
  %132 = vmatprep.subr.mxu0 0.0
  %133 = vmatpush1.msra.mxu0 0.0
  %134 = vmatprep.subr.mxu0 0.0
  %135 = vmatpush1.msra.mxu0 0.0
  %136 = vmatprep.subr.mxu0 0.0
  %137 = vmatpush1.msra.mxu0 0.0
  %138 = vmatprep.subr.mxu0 0.0
  %139 = vmatpush1.msra.mxu0 0.0
  %140 = vmatprep.subr.mxu0 0.0
  %141 = vmatpush1.msra.mxu0 0.0
  %142 = vmatprep.subr.mxu0 0.0
  %143 = vmatpush1.msra.mxu0 0.0
  %144 = vmatprep.subr.mxu0 0.0
  %145 = vmatpush1.msra.mxu0 0.0
  %146 = vmatprep.subr.mxu0 0.0
  %147 = vmatpush1.msra.mxu0 0.0
  %148 = vmatprep.subr.mxu0 0.0
  %149 = vmatpush1.msra.mxu0 0.0
  %150 = vmatprep.subr.mxu0 0.0
  %151 = vmatpush1.msra.mxu0 0.0
  %152 = vmatprep.subr.mxu0 0.0
  %153 = vmatpush1.msra.mxu0 0.0
  %154 = vmatprep.subr.mxu0 0.0
  %155 = vmatpush1.msra.mxu0 0.0
  %156 = vmatprep.subr.mxu0 0.0
  %157 = vmatpush1.msra.mxu0 0.0
  %158 = vmatprep.subr.mxu0 0.0
  %159 = vmatpush1.msra.mxu0 0.0
  %160 = vmatprep.subr.mxu0 0.0
  %161 = vmatpush1.msra.mxu0 0.0
  %162 = vmatprep.subr.mxu0 0.0
  %163 = vmatpush1.msra.mxu0 0.0
  %164 = vmatprep.subr.mxu0 0.0
  %165 = vmatpush1.msra.mxu0 0.0
  %166 = vmatprep.subr.mxu0 0.0
  %167 = vmatpush1.msra.mxu0 0.0
  %168 = vmatprep.subr.mxu0 0.0
  %169 = vmatpush1.msra.mxu0 0.0
  %170 = vmatprep.subr.mxu0 0.0
  %171 = vmatpush1.msra.mxu0 0.0
  %172 = vmatprep.mubr.f32.mxu0 0.0
  %173 = vmatmul.mubr.f32.gmra.mrb[0].mxu0 %v106
  %v174 = vpop.f32.mrb[0].mxu0
  %v175 = vadd.f32 %v103, %v174
  %v176 = vpop.f32.mrb[0].mxu0
  %177 = vdwg.mxu0
  %179 = vrot.lane.b32.xlu0 %v13, 40
  %v180 = vpop.permute.xlu0 %179
  %v182 = vmul.f32 %v96, %v180
  %184 = vrot.lane.b32.xlu0 %v182, 120
  %v185 = vpop.permute.xlu0 %184
  %v187 = vadd.f32 %v182, %v185
  %189 = vrot.lane.b32.xlu0 %v96, 8
  %v190 = vpop.permute.xlu0 %189
  %v192 = vadd.f32 %v187, %v190
  %193 = vrot.lane.b32.xlu0 %v11, 8
  %v194 = vpop.permute.xlu0 %193
  %v196 = vmul.f32 %v175, %v194
  %198 = vrot.lane.b32.xlu0 %v196, 120
  %v199 = vpop.permute.xlu0 %198
  %v201 = vsel %vm25, %v199, 0.0
  %202 = vadd.xlane.f32.xlu0 %v201
  %v203 = vpop.xlane.xlu0 %202
  %v204 = vmul.f32 %v175, %v203
  %v205 = vadd.f32 %v11, %v204
  %207 = vrot.lane.b32.xlu0 %v192, 88
  %v208 = vpop.permute.xlu0 %207
  %v210 = vadd.f32 %v205, %v208
  %212 = vrot.lane.b32.xlu0 %v12, 8
  %v213 = vpop.permute.xlu0 %212
  %v215 = vmul.f32 %v175, %v213
  %217 = vrot.lane.b32.xlu0 %v215, 120
  %v218 = vpop.permute.xlu0 %217
  %v220 = vsel %vm25, %v218, 0.0
  %221 = vadd.xlane.f32.xlu0 %v220
  %v222 = vpop.xlane.xlu0 %221
  %v223 = vmul.f32 %v175, %v222
  %v224 = vadd.f32 %v12, %v223
  %v225 = vadd.f32 %v224, %v208
  %226 = vst.msk [vmem:[%s2] sm:$0xff] %vm25, %v210
  %227 = vst.msk [vmem:[%s2 + $0x8] sm:$0xff] %vm25, %v225
  %229 = vrot.lane.b32.xlu0 %v175, 8
  %v230 = vpop.permute.xlu0 %229
  %vm232 = vcmask 195648
  %233 = vst.msk [vmem:[%s2] sm:$0xff] %vm232, %v230
  // Predicated region
  $region10: #{transition_forward.1} parent=0 // pred_check
    _
  $region11: #{transition_forward.1} parent=0 // pred_check_branch
    %235 = sbr.rel (0) target = $region13
  $region12: #{transition_forward.1} parent=0 // pred_region
    _
  $region13: #{transition_forward.1} parent=0 // pred_fallthru
    _
  // Predicated region
  $region14: #{transition_forward.1} parent=0 // pred_check
    _
  $region15: #{transition_forward.1} parent=0 // pred_check_branch
    %237 = sbr.rel (0) target = $region17
  $region16: #{transition_forward.1} parent=0 // pred_region
    _
  $region17: #{transition_forward.1} parent=0 // pred_fallthru
    _

</llo_original>
